<compile_context>
chip_gen: v7x
topology: tpu7x:2x2x1
jax: 0.10.0
libtpu: 0.0.40
codegen_flags: <defaults>
</compile_context>

<pallas_src>
import functools
import math

import jax
import jax.numpy as jnp
from jax import lax
from jax.experimental import pallas as pl
from jax.experimental.pallas import tpu as pltpu


def _largest_divisor_leq(n, cap):
    cap = max(1, min(n, cap))
    for d in range(cap, 0, -1):
        if n % d == 0:
            return d
    return 1


def _pad_channels(c, w_out):
    # Pad the channel count so w_out * c is a multiple of 128 (fully
    # lane-dense, unmasked stores and clean MXU tiles).  Fall back to a
    # multiple of 8 if that would blow the channel count up (odd w_out).
    step = 128 // math.gcd(w_out, 128)
    if step > 4 * max(8, c):
        step = 8
    return -(-c // step) * step


def _vmem_limit_bytes(block_bytes):
    # block_bytes already includes double buffering; add headroom for
    # compiler temporaries and clamp to something valid on every generation
    # (v7x has 64 MiB physical VMEM per TensorCore).
    return int(min(60 * 1024 * 1024, max(4 * 1024 * 1024, 2 * block_bytes)))


# ---------------------------------------------------------------------------
# kernel 1: spatial (1,kh,kw) conv as a single GEMM + per-(n,t-tile) BN stats
# ---------------------------------------------------------------------------
def _spatial_conv_kernel(x_ref, w_ref, b_ref, y_ref, sum_ref, sq_ref, *,
                         m_rows):
    # x is already im2col'ed wrapper-side: lane axis = (kh-tap, w_in, c_in),
    # so this is one plain lane-dense GEMM.  bf16 operands, f32 accumulate.
    lhs = x_ref[...].reshape(m_rows, x_ref.shape[-1])
    acc = jnp.dot(lhs, w_ref[...], preferred_element_type=jnp.float32)
    acc = acc + b_ref[...]

    y_bf = acc.astype(y_ref.dtype)
    y_ref[...] = y_bf.reshape(y_ref.shape)        # unmasked lane-dense store

    # BN batch statistics computed from the same bf16-rounded values that get
    # normalized later.  f32 sums, kept per (w, channel) lane; the cross-n /
    # cross-w reduction happens inside the temporal kernel.
    yf = y_bf.astype(jnp.float32)
    sum_ref[...] = jnp.sum(yf, axis=0, keepdims=True)
    sq_ref[...] = jnp.sum(yf * yf, axis=0, keepdims=True)


# ---------------------------------------------------------------------------
# kernel 2: BN scale/shift + ReLU + temporal (kt,1,1) conv
# ---------------------------------------------------------------------------
def _temporal_conv_kernel(y_ref, w_ref, b_ref, csum_ref, csq_ref,
                          gam_ref, bet_ref, red_ref, o_ref, *,
                          kt, st, pt, t_in, t_out, tile_h, inv_count, eps):
    lane_mid = y_ref.shape[-1]

    # ---- BN affine from the per-(n, t-tile) partial sums (recomputed per
    # step; a couple of steps total, and it removes the XLA glue dispatch).
    s_tot = jnp.sum(csum_ref[...], axis=(0, 1))           # (1, lane_mid)
    q_tot = jnp.sum(csq_ref[...], axis=(0, 1))            # (1, lane_mid)
    # red_ref is the 0/1 "sum over w lane-groups and rebroadcast" matrix, so
    # the per-channel reduction stays lane-dense (one tiny MXU dot each).
    mean = jnp.dot(s_tot, red_ref[...],
                   preferred_element_type=jnp.float32) * inv_count
    msq = jnp.dot(q_tot, red_ref[...],
                  preferred_element_type=jnp.float32) * inv_count
    var = jnp.maximum(msq - mean * mean, 0.0)              # biased variance
    scale = gam_ref[...] * lax.rsqrt(var + eps)
    shift = bet_ref[...] - mean * scale

    # ---- BN apply + ReLU exactly once per input element, bf16 for the MXU.
    m_rows = t_in * tile_h
    yv = y_ref[...].reshape(m_rows, lane_mid).astype(jnp.float32)
    scale_b = jnp.broadcast_to(scale, (m_rows, lane_mid))  # hoisted broadcasts
    shift_b = jnp.broadcast_to(shift, (m_rows, lane_mid))
    z = jnp.maximum(yv * scale_b + shift_b, 0.0).astype(jnp.bfloat16)

    # ---- temporal conv: one GEMM per tap (M = t_in*tile_h), then accumulate
    # sublane-offset slices into the output frames with VPU adds.  Statically
    # skip zero-padded taps (no masking, no wasted MXU pushes at the edges).
    o_ref[...] = jnp.broadcast_to(b_ref[...], o_ref.shape)
    for dt in range(kt):
        p = jnp.dot(z, w_ref[dt], preferred_element_type=jnp.float32)
        for to in range(t_out):
            src = to * st + dt - pt
            if 0 <= src < t_in:
                o_ref[to] = o_ref[to] + p[src * tile_h:(src + 1) * tile_h]


# ---------------------------------------------------------------------------
# wrapper
# ---------------------------------------------------------------------------
def spatio_temporal_conv(x_ncdhw, params, *, kernel_size, stride, padding,
                         eps=1e-5):
    kt, kh, kw = kernel_size
    st, sh, sw = stride
    pt, ph, pw = padding

    ws, bs = params["w_spatial"], params["b_spatial"]      # (kh*kw,Cin,Cm),(Cm,)
    gamma, beta = params["bn_gamma"], params["bn_beta"]
    wt, bt = params["w_temporal"], params["b_temporal"]    # (kt,Cm,Co),(Co,)
    c_mid = ws.shape[-1]
    c_out = wt.shape[-1]

    n, c_in, t, h, w = x_ncdhw.shape
    hp, wp = h + 2 * ph, w + 2 * pw
    h_out = (hp - kh) // sh + 1
    w_out = (wp - kw) // sw + 1
    t_out = (t + 2 * pt - kt) // st + 1

    # ---- channel padding so lane widths are multiples of 128 ----------------
    c_mid_p = _pad_channels(c_mid, w_out)
    c_out_p = _pad_channels(c_out, w_out)
    lane_mid = w_out * c_mid_p
    lane_out = w_out * c_out_p
    dm, do = c_mid_p - c_mid, c_out_p - c_out
    # Padded channels: zero weights/bias/beta (gamma padded with 1) so they
    # stay exactly zero through BN+ReLU and contribute nothing to the output.
    ws_p = jnp.pad(ws, ((0, 0), (0, 0), (0, dm)))
    bs_p = jnp.pad(bs, (0, dm))
    gamma_p = jnp.pad(gamma, (0, dm), constant_values=1.0)
    beta_p = jnp.pad(beta, (0, dm))
    wt_p = jnp.pad(wt, ((0, 0), (0, dm), (0, do)))
    bt_p = jnp.pad(bt, (0, do))

    # ---- channels-last, H/W zero pad, fold (W, Cin) into lanes, im2col over
    # the kh row taps (all fused into one boundary copy), cast to bf16 --------
    x = jnp.transpose(x_ncdhw, (0, 2, 3, 4, 1))             # (N,T,H,W,Cin)
    xp = jnp.pad(x, ((0, 0), (0, 0), (ph, ph), (pw, pw), (0, 0)))
    xp = xp.reshape(n, t, hp, wp * c_in)
    xcol = jnp.concatenate(
        [xp[:, :, dy:dy + (h_out - 1) * sh + 1:sh, :] for dy in range(kh)],
        axis=-1).astype(jnp.bfloat16)                       # (N,T,h_out,kh*wp*Cin)
    k_sp = kh * wp * c_in

    # ---- width-Toeplitz spatial weight (folds kw, c_in taps and W stride) ---
    # wtz[(dy, xcol, c), (w, m)] = ws[dy, xcol - w*sw, c, m]   (0 elsewhere)
    ws4 = ws_p.reshape(kh, kw, c_in, c_mid_p)
    sel = (jnp.arange(wp)[:, None, None] ==
           (jnp.arange(w_out)[None, :, None] * sw +
            jnp.arange(kw)[None, None, :])).astype(ws_p.dtype)  # (wp,w_out,kw)
    wtz = jnp.einsum("xwk,ykcm->yxcwm", sel, ws4)
    wtz = wtz.reshape(k_sp, lane_mid).astype(jnp.bfloat16)
    bs_tiled = jnp.tile(bs_p, w_out).reshape(1, lane_mid)

    # ---- tiling: M ~ 256 rows, and keep >=2 parallel blocks when n == 1 -----
    tile_t = _largest_divisor_leq(t, max(1, 256 // max(1, h_out)))
    if n == 1 and t > 1:
        tile_t = min(tile_t, _largest_divisor_leq(t, max(1, t // 2)))
    n_tt = t // tile_t

    sp_block_bytes = 2 * (tile_t * h_out * k_sp * 2         # x block (bf16)
                          + k_sp * lane_mid * 2             # Toeplitz weight
                          + lane_mid * 4                    # bias
                          + tile_t * h_out * lane_mid * 2   # y block (bf16)
                          + 2 * lane_mid * 4)               # stat blocks

    spatial = pl.pallas_call(
        functools.partial(_spatial_conv_kernel, m_rows=tile_t * h_out),
        grid=(n, n_tt),
        in_specs=[
            pl.BlockSpec((None, tile_t, h_out, k_sp),
                         lambda ni, ti: (ni, ti, 0, 0)),
            pl.BlockSpec((k_sp, lane_mid), lambda ni, ti: (0, 0)),
            pl.BlockSpec((1, lane_mid), lambda ni, ti: (0, 0)),
        ],
        out_specs=[
            pl.BlockSpec((None, tile_t, h_out, lane_mid),
                         lambda ni, ti: (ni, ti, 0, 0)),
            pl.BlockSpec((None, None, 1, lane_mid),
                         lambda ni, ti: (ni, ti, 0, 0)),
            pl.BlockSpec((None, None, 1, lane_mid),
                         lambda ni, ti: (ni, ti, 0, 0)),
        ],
        out_shape=[
            jax.ShapeDtypeStruct((n, t, h_out, lane_mid), jnp.bfloat16),
            jax.ShapeDtypeStruct((n, n_tt, 1, lane_mid), jnp.float32),
            jax.ShapeDtypeStruct((n, n_tt, 1, lane_mid), jnp.float32),
        ],
        compiler_params=pltpu.CompilerParams(
            dimension_semantics=("parallel", "parallel"),
            vmem_limit_bytes=_vmem_limit_bytes(sp_block_bytes)),
    )
    y, csum, csq = spatial(xcol, wtz, bs_tiled)

    # ---- block-diagonal temporal weight: GEMM stays lane-dense --------------
    # wbd[dt, w*c_mid_p + c, v*c_out_p + d] = (w == v) * wt[dt, c, d]
    wbd = jnp.einsum("wv,tcd->twcvd", jnp.eye(w_out, dtype=wt_p.dtype), wt_p)
    wbd = wbd.reshape(kt, lane_mid, lane_out).astype(jnp.bfloat16)
    bt_tiled = jnp.tile(bt_p, w_out).reshape(1, lane_out)
    gamma_tiled = jnp.tile(gamma_p, w_out).reshape(1, lane_mid)
    beta_tiled = jnp.tile(beta_p, w_out).reshape(1, lane_mid)
    # 0/1 matrix: "sum over the w lane-groups of each channel, re-broadcast".
    lanes = jnp.arange(lane_mid)
    red = (lanes[:, None] % c_mid_p == lanes[None, :] % c_mid_p
           ).astype(jnp.float32)

    tile_h = _largest_divisor_leq(h_out, 32)
    if n == 1 and h_out > 1:
        tile_h = min(tile_h, _largest_divisor_leq(h_out, max(1, h_out // 2)))

    count = float(n * t * h_out * w_out)
    tp_block_bytes = 2 * (t * tile_h * lane_mid * 2          # y block (bf16)
                          + kt * lane_mid * lane_out * 2     # wbd (bf16)
                          + lane_out * 4 + 2 * lane_mid * 4  # bias, gamma/beta
                          + 2 * n * n_tt * lane_mid * 4      # csum, csq
                          + lane_mid * lane_mid * 4          # reduce matrix
                          + t_out * tile_h * lane_out * 4)   # output block

    temporal = pl.pallas_call(
        functools.partial(_temporal_conv_kernel, kt=kt, st=st, pt=pt,
                          t_in=t, t_out=t_out, tile_h=tile_h,
                          inv_count=1.0 / count, eps=eps),
        grid=(n, h_out // tile_h),
        in_specs=[
            pl.BlockSpec((None, t, tile_h, lane_mid),
                         lambda ni, hi: (ni, 0, hi, 0)),
            pl.BlockSpec((kt, lane_mid, lane_out), lambda ni, hi: (0, 0, 0)),
            pl.BlockSpec((1, lane_out), lambda ni, hi: (0, 0)),
            pl.BlockSpec((n, n_tt, 1, lane_mid),
                         lambda ni, hi: (0, 0, 0, 0)),
            pl.BlockSpec((n, n_tt, 1, lane_mid),
                         lambda ni, hi: (0, 0, 0, 0)),
            pl.BlockSpec((1, lane_mid), lambda ni, hi: (0, 0)),
            pl.BlockSpec((1, lane_mid), lambda ni, hi: (0, 0)),
            pl.BlockSpec((lane_mid, lane_mid), lambda ni, hi: (0, 0)),
        ],
        out_specs=pl.BlockSpec((None, t_out, tile_h, lane_out),
                               lambda ni, hi: (ni, 0, hi, 0)),
        out_shape=jax.ShapeDtypeStruct((n, t_out, h_out, lane_out),
                                       jnp.float32),
        compiler_params=pltpu.CompilerParams(
            dimension_semantics=("parallel", "parallel"),
            vmem_limit_bytes=_vmem_limit_bytes(tp_block_bytes)),
    )
    out = temporal(y, wbd, bt_tiled, csum, csq, gamma_tiled, beta_tiled, red)
    out = out.reshape(n, t_out, h_out, w_out, c_out_p)[..., :c_out]
    return jnp.transpose(out, (0, 4, 1, 2, 3))              # back to NCDHW


def init_params(key, in_channels, out_channels, kernel_size):
    kt, kh, kw = kernel_size
    c_mid = int(math.floor(kt * kh * kw * in_channels * out_channels /
                           (kh * kw * in_channels + kt * out_channels)))
    k1, k2, k3, k4 = jax.random.split(key, 4)
    bnd_s = 1.0 / math.sqrt(in_channels * kh * kw)
    bnd_t = 1.0 / math.sqrt(c_mid * kt)
    # kernel-side layouts: spatial (kh*kw, c_in, c_mid), temporal (kt, c_mid, c_out)
    params = dict(
        w_spatial=jax.random.uniform(k1, (kh * kw, in_channels, c_mid),
                                     jnp.float32, -bnd_s, bnd_s),
        b_spatial=jax.random.uniform(k2, (c_mid,), jnp.float32, -bnd_s, bnd_s),
        bn_gamma=jnp.ones((c_mid,), jnp.float32),
        bn_beta=jnp.zeros((c_mid,), jnp.float32),
        w_temporal=jax.random.uniform(k3, (kt, c_mid, out_channels),
                                      jnp.float32, -bnd_t, bnd_t),
        b_temporal=jax.random.uniform(k4, (out_channels,), jnp.float32,
                                      -bnd_t, bnd_t),
    )
    return params, c_mid


def reference_forward(x, params, *, kernel_size, stride, padding, eps=1e-5):
    """Pure-JAX replica of the PyTorch forward (for validation)."""
    kt, kh, kw = kernel_size
    st, sh, sw = stride
    pt, ph, pw = padding
    c_in = x.shape[1]
    ws = params["w_spatial"].reshape(kh, kw, c_in, -1).transpose(3, 2, 0, 1)
    ws = ws[:, :, None, :, :]                               # OIDHW (D=1)
    y = lax.conv_general_dilated(
        x, ws, window_strides=(1, sh, sw),
        padding=[(0, 0), (ph, ph), (pw, pw)],
        dimension_numbers=("NCDHW", "OIDHW", "NCDHW"))
    y = y + params["b_spatial"][None, :, None, None, None]
    mean = jnp.mean(y, axis=(0, 2, 3, 4), keepdims=True)
    var = jnp.var(y, axis=(0, 2, 3, 4), keepdims=True)
    yn = (y - mean) / jnp.sqrt(var + eps)
    g = params["bn_gamma"][None, :, None, None, None]
    b = params["bn_beta"][None, :, None, None, None]
    z = jnp.maximum(g * yn + b, 0.0)
    wt = params["w_temporal"].transpose(2, 1, 0)[:, :, :, None, None]  # OIDHW
    out = lax.conv_general_dilated(
        z, wt, window_strides=(st, 1, 1),
        padding=[(pt, pt), (0, 0), (0, 0)],
        dimension_numbers=("NCDHW", "OIDHW", "NCDHW"))
    return out + params["b_temporal"][None, :, None, None, None]


if __name__ == "__main__":
    in_channels, out_channels = 4, 8
    kernel_size = (3, 3, 3)
    stride = (1, 1, 1)
    padding = (1, 1, 1)

    key = jax.random.PRNGKey(0)
    kx, kp = jax.random.split(key)
    # PyTorch Conv3d input layout NCDHW: (N, C, T, H, W)
    x = jax.random.normal(kx, (2, in_channels, 8, 16, 16), jnp.float32)
    params, c_mid = init_params(kp, in_channels, out_channels, kernel_size)

    out = spatio_temporal_conv(x, params, kernel_size=kernel_size,
                               stride=stride, padding=padding)
    out = jax.block_until_ready(out)

    ref = reference_forward(x, params, kernel_size=kernel_size,
                            stride=stride, padding=padding)
    assert out.shape == ref.shape == (2, out_channels, 8, 16, 16), out.shape
    max_err = float(jnp.max(jnp.abs(out - ref)))
    assert jnp.allclose(out, ref, rtol=2e-2, atol=2e-2), max_err
    print("KERNEL_OK")
</pallas_src>

<mosaic_0001>
module attributes {stable_mosaic.version = 11 : i64} {
  func.func @_spatial_conv_kernel(%arg0: i32, %arg1: i32, %arg2: memref<1x8x16x216xbf16, #tpu.memory_space<vmem>>, %arg3: memref<216x256xbf16, #tpu.memory_space<vmem>>, %arg4: memref<1x256xf32, #tpu.memory_space<vmem>>, %arg5: memref<1x8x16x256xbf16, #tpu.memory_space<vmem>>, %arg6: memref<1x1x1x256xf32, #tpu.memory_space<vmem>>, %arg7: memref<1x1x1x256xf32, #tpu.memory_space<vmem>>) attributes {dimension_semantics = [#tpu.dimension_semantics<parallel>, #tpu.dimension_semantics<parallel>], iteration_bounds = array<i64: 2, 1>, scalar_prefetch = 0 : i64, scratch_operands = 0 : i64, tpu.core_type = #tpu.core_type<tc>, window_params = [{transform_indices = @transform_0, window_bounds = array<i64: 1, 8, 16, 216>}, {pipeline_mode = #tpu.pipeline_mode<synchronous>, transform_indices = @transform_1, window_bounds = array<i64: 216, 256>}, {pipeline_mode = #tpu.pipeline_mode<synchronous>, transform_indices = @transform_2, window_bounds = array<i64: 1, 256>}, {transform_indices = @transform_3, window_bounds = array<i64: 1, 8, 16, 256>}, {transform_indices = @transform_4, window_bounds = array<i64: 1, 1, 1, 256>}, {transform_indices = @transform_5, window_bounds = array<i64: 1, 1, 1, 256>}]} {
    %c0 = arith.constant 0 : index
    %c0_0 = arith.constant 0 : index
    %c0_1 = arith.constant 0 : index
    %c0_2 = arith.constant 0 : index
    %0 = vector.load %arg2[%c0, %c0_0, %c0_1, %c0_2] : memref<1x8x16x216xbf16, #tpu.memory_space<vmem>>, vector<1x8x16x216xbf16>
    %1 = vector.shape_cast %0 : vector<1x8x16x216xbf16> to vector<8x16x216xbf16>
    %2 = vector.shape_cast %1 : vector<8x16x216xbf16> to vector<128x216xbf16>
    %c0_3 = arith.constant 0 : index
    %c0_4 = arith.constant 0 : index
    %3 = vector.load %arg3[%c0_3, %c0_4] : memref<216x256xbf16, #tpu.memory_space<vmem>>, vector<216x256xbf16>
    %cst = arith.constant dense<0.000000e+00> : vector<128x256xf32>
    %4 = tpu.matmul %2, %3, %cst {dimension_numbers = #tpu.dot_dimension_numbers<[1], [0], [0], [1], [0, 0, 1, 1], [], []>} : vector<128x216xbf16>, vector<216x256xbf16>, vector<128x256xf32> -> vector<128x256xf32>
    %c0_5 = arith.constant 0 : index
    %c0_6 = arith.constant 0 : index
    %5 = vector.load %arg4[%c0_5, %c0_6] : memref<1x256xf32, #tpu.memory_space<vmem>>, vector<1x256xf32>
    %6 = vector.broadcast %5 : vector<1x256xf32> to vector<128x256xf32>
    %7 = arith.addf %4, %6 : vector<128x256xf32>
    %8 = arith.truncf %7 : vector<128x256xf32> to vector<128x256xbf16>
    %9 = vector.shape_cast %8 : vector<128x256xbf16> to vector<8x16x256xbf16>
    %c0_7 = arith.constant 0 : index
    %c0_8 = arith.constant 0 : index
    %c0_9 = arith.constant 0 : index
    %c0_10 = arith.constant 0 : index
    %10 = vector.load %arg5[%c0_7, %c0_8, %c0_9, %c0_10] : memref<1x8x16x256xbf16, #tpu.memory_space<vmem>>, vector<1x8x16x256xbf16>
    %11 = vector.shape_cast %10 : vector<1x8x16x256xbf16> to vector<8x16x256xbf16>
    %12 = vector.shape_cast %9 : vector<8x16x256xbf16> to vector<1x8x16x256xbf16>
    tpu.vector_store %arg5[%c0_7, %c0_8, %c0_9, %c0_10], %12 {strides = array<i32>} : memref<1x8x16x256xbf16, #tpu.memory_space<vmem>>, vector<1x8x16x256xbf16>,
    %13 = arith.extf %8 : vector<128x256xbf16> to vector<128x256xf32>
    %cst_11 = arith.constant dense<0.000000e+00> : vector<256xf32>
    %14 = vector.multi_reduction <add>, %13, %cst_11 [0] : vector<128x256xf32> to vector<256xf32>
    %15 = vector.shape_cast %14 : vector<256xf32> to vector<1x256xf32>
    %c0_12 = arith.constant 0 : index
    %c0_13 = arith.constant 0 : index
    %c0_14 = arith.constant 0 : index
    %c0_15 = arith.constant 0 : index
    %16 = vector.load %arg6[%c0_12, %c0_13, %c0_14, %c0_15] : memref<1x1x1x256xf32, #tpu.memory_space<vmem>>, vector<1x1x1x256xf32>
    %17 = vector.shape_cast %16 : vector<1x1x1x256xf32> to vector<1x256xf32>
    %18 = vector.shape_cast %15 : vector<1x256xf32> to vector<1x1x1x256xf32>
    tpu.vector_store %arg6[%c0_12, %c0_13, %c0_14, %c0_15], %18 {strides = array<i32>} : memref<1x1x1x256xf32, #tpu.memory_space<vmem>>, vector<1x1x1x256xf32>,
    %19 = arith.mulf %13, %13 : vector<128x256xf32>
    %cst_16 = arith.constant dense<0.000000e+00> : vector<256xf32>
    %20 = vector.multi_reduction <add>, %19, %cst_16 [0] : vector<128x256xf32> to vector<256xf32>
    %21 = vector.shape_cast %20 : vector<256xf32> to vector<1x256xf32>
    %c0_17 = arith.constant 0 : index
    %c0_18 = arith.constant 0 : index
    %c0_19 = arith.constant 0 : index
    %c0_20 = arith.constant 0 : index
    %22 = vector.load %arg7[%c0_17, %c0_18, %c0_19, %c0_20] : memref<1x1x1x256xf32, #tpu.memory_space<vmem>>, vector<1x1x1x256xf32>
    %23 = vector.shape_cast %22 : vector<1x1x1x256xf32> to vector<1x256xf32>
    %24 = vector.shape_cast %21 : vector<1x256xf32> to vector<1x1x1x256xf32>
    tpu.vector_store %arg7[%c0_17, %c0_18, %c0_19, %c0_20], %24 {strides = array<i32>} : memref<1x1x1x256xf32, #tpu.memory_space<vmem>>, vector<1x1x1x256xf32>,
    return
  }
  func.func @transform_0(%arg0: i32, %arg1: i32) -> (i32, i32, i32, i32) {
    %c0_i32 = arith.constant 0 : i32
    %c0_i32_0 = arith.constant 0 : i32
    %c0_i32_1 = arith.constant 0 : i32
    return %arg0, %arg1, %c0_i32, %c0_i32_0 : i32, i32, i32, i32
  }
  func.func @transform_1(%arg0: i32, %arg1: i32) -> (i32, i32) {
    %c0_i32 = arith.constant 0 : i32
    %c0_i32_0 = arith.constant 0 : i32
    %c0_i32_1 = arith.constant 0 : i32
    return %c0_i32, %c0_i32_0 : i32, i32
  }
  func.func @transform_2(%arg0: i32, %arg1: i32) -> (i32, i32) {
    %c0_i32 = arith.constant 0 : i32
    %c0_i32_0 = arith.constant 0 : i32
    %c0_i32_1 = arith.constant 0 : i32
    return %c0_i32, %c0_i32_0 : i32, i32
  }
  func.func @transform_3(%arg0: i32, %arg1: i32) -> (i32, i32, i32, i32) {
    %c0_i32 = arith.constant 0 : i32
    %c0_i32_0 = arith.constant 0 : i32
    %c0_i32_1 = arith.constant 0 : i32
    return %arg0, %arg1, %c0_i32, %c0_i32_0 : i32, i32, i32, i32
  }
  func.func @transform_4(%arg0: i32, %arg1: i32) -> (i32, i32, i32, i32) {
    %c0_i32 = arith.constant 0 : i32
    %c0_i32_0 = arith.constant 0 : i32
    %c0_i32_1 = arith.constant 0 : i32
    return %arg0, %arg1, %c0_i32, %c0_i32_0 : i32, i32, i32, i32
  }
  func.func @transform_5(%arg0: i32, %arg1: i32) -> (i32, i32, i32, i32) {
    %c0_i32 = arith.constant 0 : i32
    %c0_i32_0 = arith.constant 0 : i32
    %c0_i32_1 = arith.constant 0 : i32
    return %arg0, %arg1, %c0_i32, %c0_i32_0 : i32, i32, i32, i32
  }
}

</mosaic_0001>

<llo_original>
// kernel: tpu_custom_call.1
$region0: #{tpu_custom_call.1}
  #allocation0 [shape = 'u32[]', space=smem, size = 0x4, offset = 0x4, fixed_abs, tag = 'smem constant byte address 0x4 - core index']
  #allocation1 [shape = 'u32[144,128]{1,0:T(1,128)}', space=vmem, size = 0x12000, scoped, tag = 'internal scratch']
  %s0 = inlined_call_operand.hbm [shape: bf16[2,8,16,216], index: 0, kind: input, shape index: {}]
  %s1 = inlined_call_operand.hbm [shape: bf16[216,256], index: 1, kind: input, shape index: {}]
  %s2 = inlined_call_operand.vmem [shape: f32[1,256], index: 2, kind: input, shape index: {}]
  %s3 = inlined_call_operand.hbm [shape: bf16[2,8,16,256], index: 3, kind: output, shape index: {0}]
  %s4 = inlined_call_operand.hbm [shape: f32[2,1,1,256], index: 4, kind: output, shape index: {1}]
  %s5 = inlined_call_operand.hbm [shape: f32[2,1,1,256], index: 5, kind: output, shape index: {2}]
  %6 = xla_tuple %s3, %s4, %s5
  %s7 = sld [smem:[#allocation0]]
  $region69: #{tpu_custom_call.1} parent=0
    _
  %s9 = ssub.s32 1, %s7
  %s10 = scalar_select 0, %s9, %s7
  $region1: #{tpu_custom_call.1} parent=0
    #allocation2 [shape = 'u8[131072]{0}', space=vmem, size = 0x20000, scoped, tag = 'input window, operand 0']
    #allocation3 [shape = 's32[2]{0}', space=sflag, size = 0x8, scoped, tag = 'scoped memory for tpu_custom_call.1']
    #allocation4 [shape = 's32[2]{0}', space=sflag, size = 0x8, scoped, tag = 'scoped memory for tpu_custom_call.1']
    #allocation5 [shape = 'u8[110592]{0}', space=vmem, size = 0x1b000, scoped, tag = 'input window, operand 1, single buffered']
    #allocation6 [shape = 's32[1]{0}', space=sflag, size = 0x4, scoped, tag = 'scoped memory for tpu_custom_call.1']
    #allocation7 [shape = 'u8[131072]{0}', space=vmem, size = 0x20000, scoped, tag = 'output window, operand 0']
    #allocation8 [shape = 'u8[2048]{0}', space=vmem, size = 0x800, scoped, tag = 'output window, operand 1']
    #allocation9 [shape = 's32[2]{0}', space=sflag, size = 0x8, scoped, tag = 'scoped memory for tpu_custom_call.1']
    #allocation10 [shape = 'u8[2048]{0}', space=vmem, size = 0x800, scoped, tag = 'output window, operand 2']
    %11 = vsyncpa [#allocation3], 0
    %s12 = scalar_lea.sflag [#allocation3], 1
    %13 = vsyncpa %s12, 0
    %14 = vsyncpa [#allocation6], 0
    %15 = vsyncpa [#allocation4], 0
    %s16 = scalar_lea.sflag [#allocation4], 1
    %17 = vsyncpa %s16, 0
    %18 = vsyncpa [#allocation9], 0
    %s19 = scalar_lea.sflag [#allocation9], 1
    %20 = vsyncpa %s19, 0
    loop: start=0, step=1, limit=4
    $region2: #{tpu_custom_call.1} parent=1 // loop_pre_header
      _
    $region3: #{tpu_custom_call.1} parent=1 // loop_header
      %s22 = sphi 0, %s26
      %p23 = scmp.ge.s32.totalorder %s22, 4
      %s29 = sphi 0, %s41
      %s30 = sphi 0, %s37
      %s31 = sphi 0, %s29
      %s32 = sphi 0, %s30
      %s33 = sphi 0, %s31
      %s34 = sphi 0, %s32
      %s46 = sphi 0, %s48
      %s49 = sphi 0, %s46
      %s50 = sphi 0, %s49
      %s66 = sphi 0, %s50
      %s70 = sphi 0, %s70
      %s72 = sphi 0, %s70
      %s73 = sphi 0, %s72
      %s87 = sphi 0, %s73
      %s91 = sphi 0, %s91
      %s93 = sphi 0, %s91
      %s94 = sphi 0, %s93
      %s108 = sphi 0, %s94
      %s116 = sphi 0, %s118
      %s119 = sphi 0, %s116
      %s120 = sphi 0, %s119
      %s136 = sphi 0, %s120
      %s144 = sphi 0, %s146
      %s147 = sphi 0, %s144
      %s148 = sphi 0, %s147
      %s164 = sphi 0, %s148
      %s172 = sphi 0, %s174
      %s175 = sphi 0, %s172
      %s176 = sphi 0, %s175
      %s192 = sphi 0, %s176
    $region4: #{tpu_custom_call.1} parent=1 // loop_header_branch
      %25 = sbr.rel (%p23) target = $region8
    $region5: #{tpu_custom_call.1} parent=1 // loop_body
      %s27 = ssub.s32 %s22, 1
      %s28 = ssub.s32 %s22, 2
      %s35 = sadd.s32 1, %s30
      %p36 = scmp.ge.s32.totalorder %s35, 1
      %s37 = scalar_select %p36, 0, %s35
      %s38 = sadd.s32 1, %s29
      %s39 = scalar_select %p36, %s38, %s29
      %p40 = scmp.ge.s32.totalorder %s39, 2
      %s41 = scalar_select %p40, 0, %s39
      %s42 = ssub.s32 %s29, %s41
      %s43 = ssub.s32 %s30, %s37
      %s44 = sor.u32 %s42, %s43
      %p45 = scmp.eq.s32.totalorder %s44, 0
      %s47 = sadd.s32 %s46, 1
      %s48 = scalar_select %p45, %s46, %s47
      %p51 = pneg %p45
      %p52 = scmp.eq.s32.totalorder %s22, 1
      %p53 = por %p51, %p52
      %p54 = scmp.ne.s32.totalorder %s46, %s49
      %p55 = scmp.eq.s32.totalorder %s22, 0
      %p56 = por %p54, %p55
      %p57 = scmp.ne.s32.totalorder %s46, %s49
      %p58 = scmp.eq.s32.totalorder %s27, 1
      %p59 = por %p57, %p58
      %p60 = scmp.ne.s32.totalorder %s49, %s50
      %p61 = scmp.eq.s32.totalorder %s27, 0
      %p62 = por %p60, %p61
      %p63 = scmp.ne.s32.totalorder %s49, %s50
      %p64 = scmp.eq.s32.totalorder %s28, 1
      %p65 = por %p63, %p64
      %p67 = scmp.ne.s32.totalorder %s50, %s66
      %p68 = scmp.eq.s32.totalorder %s28, 0
      %p69 = por %p67, %p68
      %s71 = sadd.s32 %s70, 1
      %p74 = scmp.eq.s32.totalorder %s22, 1
      %p75 = scmp.ne.s32.totalorder %s70, %s72
      %p76 = scmp.eq.s32.totalorder %s22, 0
      %p77 = por %p75, %p76
      %p78 = scmp.ne.s32.totalorder %s70, %s72
      %p79 = scmp.eq.s32.totalorder %s27, 1
      %p80 = por %p78, %p79
      %p81 = scmp.ne.s32.totalorder %s72, %s73
      %p82 = scmp.eq.s32.totalorder %s27, 0
      %p83 = por %p81, %p82
      %p84 = scmp.ne.s32.totalorder %s72, %s73
      %p85 = scmp.eq.s32.totalorder %s28, 1
      %p86 = por %p84, %p85
      %p88 = scmp.ne.s32.totalorder %s73, %s87
      %p89 = scmp.eq.s32.totalorder %s28, 0
      %p90 = por %p88, %p89
      %s92 = sadd.s32 %s91, 1
      %p95 = scmp.eq.s32.totalorder %s22, 1
      %p96 = scmp.ne.s32.totalorder %s91, %s93
      %p97 = scmp.eq.s32.totalorder %s22, 0
      %p98 = por %p96, %p97
      %p99 = scmp.ne.s32.totalorder %s91, %s93
      %p100 = scmp.eq.s32.totalorder %s27, 1
      %p101 = por %p99, %p100
      %p102 = scmp.ne.s32.totalorder %s93, %s94
      %p103 = scmp.eq.s32.totalorder %s27, 0
      %p104 = por %p102, %p103
      %p105 = scmp.ne.s32.totalorder %s93, %s94
      %p106 = scmp.eq.s32.totalorder %s28, 1
      %p107 = por %p105, %p106
      %p109 = scmp.ne.s32.totalorder %s94, %s108
      %p110 = scmp.eq.s32.totalorder %s28, 0
      %p111 = por %p109, %p110
      %s112 = ssub.s32 %s29, %s41
      %s113 = ssub.s32 %s30, %s37
      %s114 = sor.u32 %s112, %s113
      %p115 = scmp.eq.s32.totalorder %s114, 0
      %s117 = sadd.s32 %s116, 1
      %s118 = scalar_select %p115, %s116, %s117
      %p121 = pneg %p115
      %p122 = scmp.eq.s32.totalorder %s22, 1
      %p123 = por %p121, %p122
      %p124 = scmp.ne.s32.totalorder %s116, %s119
      %p125 = scmp.eq.s32.totalorder %s22, 0
      %p126 = por %p124, %p125
      %p127 = scmp.ne.s32.totalorder %s116, %s119
      %p128 = scmp.eq.s32.totalorder %s27, 1
      %p129 = por %p127, %p128
      %p130 = scmp.ne.s32.totalorder %s119, %s120
      %p131 = scmp.eq.s32.totalorder %s27, 0
      %p132 = por %p130, %p131
      %p133 = scmp.ne.s32.totalorder %s119, %s120
      %p134 = scmp.eq.s32.totalorder %s28, 1
      %p135 = por %p133, %p134
      %p137 = scmp.ne.s32.totalorder %s120, %s136
      %p138 = scmp.eq.s32.totalorder %s28, 0
      %p139 = por %p137, %p138
      %s140 = ssub.s32 %s29, %s41
      %s141 = ssub.s32 %s30, %s37
      %s142 = sor.u32 %s140, %s141
      %p143 = scmp.eq.s32.totalorder %s142, 0
      %s145 = sadd.s32 %s144, 1
      %s146 = scalar_select %p143, %s144, %s145
      %p149 = pneg %p143
      %p150 = scmp.eq.s32.totalorder %s22, 1
      %p151 = por %p149, %p150
      %p152 = scmp.ne.s32.totalorder %s144, %s147
      %p153 = scmp.eq.s32.totalorder %s22, 0
      %p154 = por %p152, %p153
      %p155 = scmp.ne.s32.totalorder %s144, %s147
      %p156 = scmp.eq.s32.totalorder %s27, 1
      %p157 = por %p155, %p156
      %p158 = scmp.ne.s32.totalorder %s147, %s148
      %p159 = scmp.eq.s32.totalorder %s27, 0
      %p160 = por %p158, %p159
      %p161 = scmp.ne.s32.totalorder %s147, %s148
      %p162 = scmp.eq.s32.totalorder %s28, 1
      %p163 = por %p161, %p162
      %p165 = scmp.ne.s32.totalorder %s148, %s164
      %p166 = scmp.eq.s32.totalorder %s28, 0
      %p167 = por %p165, %p166
      %s168 = ssub.s32 %s29, %s41
      %s169 = ssub.s32 %s30, %s37
      %s170 = sor.u32 %s168, %s169
      %p171 = scmp.eq.s32.totalorder %s170, 0
      %s173 = sadd.s32 %s172, 1
      %s174 = scalar_select %p171, %s172, %s173
      %p177 = pneg %p171
      %p178 = scmp.eq.s32.totalorder %s22, 1
      %p179 = por %p177, %p178
      %p180 = scmp.ne.s32.totalorder %s172, %s175
      %p181 = scmp.eq.s32.totalorder %s22, 0
      %p182 = por %p180, %p181
      %p183 = scmp.ne.s32.totalorder %s172, %s175
      %p184 = scmp.eq.s32.totalorder %s27, 1
      %p185 = por %p183, %p184
      %p186 = scmp.ne.s32.totalorder %s175, %s176
      %p187 = scmp.eq.s32.totalorder %s27, 0
      %p188 = por %p186, %p187
      %p189 = scmp.ne.s32.totalorder %s175, %s176
      %p190 = scmp.eq.s32.totalorder %s28, 1
      %p191 = por %p189, %p190
      %p193 = scmp.ne.s32.totalorder %s176, %s192
      %p194 = scmp.eq.s32.totalorder %s28, 0
      %p195 = por %p193, %p194
      %p196 = scmp.le.s32.totalorder 1, %s22
      %p197 = scmp.lt.s32.totalorder %s22, 3
      %p198 = pnand %p196, %p197
      %p199 = pneg %p198
      // Predicated region
      $region9: #{tpu_custom_call.1} parent=5 // pred_check
        _
      $region10: #{tpu_custom_call.1} parent=5 // pred_check_branch
        %201 = sbr.rel (%p198) target = $region12
      $region11: #{tpu_custom_call.1} parent=5 // pred_region
        %s202 = ssub.s32 %s22, 1
        // Predicated region
        $region13: #{tpu_custom_call.1} parent=11 // pred_check
          %p203 = pneg %p83
        $region14: #{tpu_custom_call.1} parent=11 // pred_check_branch
          %205 = sbr.rel (%p203) target = $region16
        $region15: #{tpu_custom_call.1} parent=11 // pred_region
          %s207 = ssub.s32 3456, 3456
          %208 = vsyncadd [#allocation6], %s207
          %s209 = sshll.u32 [#allocation5], 4
          %s210 = int_to_ptr.vmem [resolvable:$true] %s209
          %215 = dma.hbm_to_vmem [thread:$0]  %s1, 3456, %s210, [#allocation6], 128, 128, 8
        $region16: #{tpu_custom_call.1} parent=11 // pred_fallthru
          _
        // Predicated region
        $region17: #{tpu_custom_call.1} parent=11 // pred_check
          %p216 = pneg %p104
        $region18: #{tpu_custom_call.1} parent=11 // pred_check_branch
          %218 = sbr.rel (%p216) target = $region20
        $region19: #{tpu_custom_call.1} parent=11 // pred_region
          _
        $region20: #{tpu_custom_call.1} parent=11 // pred_fallthru
          _
      $region12: #{tpu_custom_call.1} parent=5 // pred_fallthru
        _
      %p219 = scmp.lt.s32.totalorder %s22, 2
      // Predicated region
      $region21: #{tpu_custom_call.1} parent=5 // pred_check
        %p220 = pneg %p219
      $region22: #{tpu_custom_call.1} parent=5 // pred_check_branch
        %222 = sbr.rel (%p220) target = $region24
      $region23: #{tpu_custom_call.1} parent=5 // pred_region
        // Predicated region
        $region25: #{tpu_custom_call.1} parent=23 // pred_check
          %p223 = pneg %p56
        $region26: #{tpu_custom_call.1} parent=23 // pred_check_branch
          %225 = sbr.rel (%p223) target = $region28
        $region27: #{tpu_custom_call.1} parent=23 // pred_region
          %s226 = sand.u32 %s46, 1
          %s227 = scalar_lea.sflag [#allocation3], %s226
          %s228 = sand.u32 %s46, 1
          %s229 = smul.addr %s228, 128
          %s230 = scalar_lea.vmem [#allocation2], %s229
          %s231 = smul.u32 8, %s30
          %s233 = ssub.s32 2048, 2048
          %234 = vsyncadd %s227, %s233
          %s235 = smul.addr %s231, 4
          %s236 = smul.addr %s29, 32
          %s237 = sadd.s32 %s235, %s236
          %s238 = smul.addr %s237, 64
          %s239 = scalar_lea.hbm %s0, %s238
          %s240 = sshll.u32 %s230, 4
          %s241 = int_to_ptr.vmem [resolvable:$true] %s240
          %246 = dma.hbm_to_vmem [thread:$0]  %s239, 2048, %s241, %s227, 128, 128, 8
        $region28: #{tpu_custom_call.1} parent=23 // pred_fallthru
          _
      $region24: #{tpu_custom_call.1} parent=5 // pred_fallthru
        _
      %p247 = scmp.le.s32.totalorder 1, %s22
      %p248 = scmp.lt.s32.totalorder %s22, 3
      %p249 = pnand %p247, %p248
      %p250 = pneg %p249
      // Predicated region
      $region29: #{tpu_custom_call.1} parent=5 // pred_check
        _
      $region30: #{tpu_custom_call.1} parent=5 // pred_check_branch
        %252 = sbr.rel (%p249) target = $region32
      $region31: #{tpu_custom_call.1} parent=5 // pred_region
        %s253 = ssub.s32 %s22, 1
        %s254 = sand.u32 %s49, 1
        %s255 = scalar_lea.sflag [#allocation3], %s254
        %s256 = sand.u32 %s49, 1
        %s257 = smul.addr %s256, 128
        %s258 = scalar_lea.vmem [#allocation2], %s257
        // Predicated region
        $region33: #{tpu_custom_call.1} parent=31 // pred_check
          %p259 = pneg %p62
        $region34: #{tpu_custom_call.1} parent=31 // pred_check_branch
          %261 = sbr.rel (%p259) target = $region36
        $region35: #{tpu_custom_call.1} parent=31 // pred_region
          %262 = dma.done %s255, 2048
        $region36: #{tpu_custom_call.1} parent=31 // pred_fallthru
          _
        // Predicated region
        $region37: #{tpu_custom_call.1} parent=31 // pred_check
          %p263 = pneg %p83
        $region38: #{tpu_custom_call.1} parent=31 // pred_check_branch
          %265 = sbr.rel (%p263) target = $region40
        $region39: #{tpu_custom_call.1} parent=31 // pred_region
          %266 = dma.done [#allocation6], 3456
        $region40: #{tpu_custom_call.1} parent=31 // pred_fallthru
          _
        %s267 = sand.u32 %s49, 1
        %s268 = scalar_lea.sflag [#allocation3], %s267
        %s269 = sand.u32 %s49, 1
        %s270 = smul.addr %s269, 128
        %s271 = scalar_lea.vmem [#allocation2], %s270
        %p272 = pneg %p62
        %p273 = pneg %p59
        %p274 = pneg %p83
        %p275 = pneg %p80
        %p276 = pneg %p104
        %p277 = pneg %p101
        %p278 = pneg %p132
        %p279 = pneg %p129
        %s280 = sand.u32 %s119, 1
        %s281 = scalar_lea.sflag [#allocation4], %s280
        %s282 = sand.u32 %s119, 1
        %s283 = smul.addr %s282, 128
        %s284 = scalar_lea.vmem [#allocation7], %s283
        %p285 = pneg %p160
        %p286 = pneg %p157
        %s287 = sand.u32 %s27, 1
        %s288 = scalar_lea.sflag [#allocation9], %s287
        %s289 = sand.u32 %s147, 1
        %s290 = smul.addr %s289, 2
        %s291 = scalar_lea.vmem [#allocation8], %s290
        %p292 = pneg %p188
        %p293 = pneg %p185
        %s294 = sand.u32 %s27, 1
        %s295 = scalar_lea.sflag [#allocation9], %s294
        %s296 = sand.u32 %s175, 1
        %s297 = smul.addr %s296, 2
        %s298 = scalar_lea.vmem [#allocation10], %s297
        %s299 = smul.u32 8, %s32
        %s300 = smul.u32 8, %s32
        %v302 = vld [vmem:[%s258] sm:$0xff]
        %v303 = vld [vmem:[%s258 + $0x8] sm:$0xff]
        %v304 = vld [vmem:[%s258 + $0x10] sm:$0xff]
        %v305 = vld [vmem:[%s258 + $0x18] sm:$0xff]
        %v306 = vld [vmem:[%s258 + $0x20] sm:$0xff]
        %v307 = vld [vmem:[%s258 + $0x28] sm:$0xff]
        %v308 = vld [vmem:[%s258 + $0x30] sm:$0xff]
        %v309 = vld [vmem:[%s258 + $0x38] sm:$0xff]
        %v310 = vld [vmem:[%s258 + $0x40] sm:$0xff]
        %v311 = vld [vmem:[%s258 + $0x48] sm:$0xff]
        %v312 = vld [vmem:[%s258 + $0x50] sm:$0xff]
        %v313 = vld [vmem:[%s258 + $0x58] sm:$0xff]
        %v314 = vld [vmem:[%s258 + $0x60] sm:$0xff]
        %v315 = vld [vmem:[%s258 + $0x68] sm:$0xff]
        %v316 = vld [vmem:[%s258 + $0x70] sm:$0xff]
        %v317 = vld [vmem:[%s258 + $0x78] sm:$0xff]
        %v318 = vld [vmem:[#allocation5] sm:$0xff]
        %v319 = vld [vmem:[#allocation5 + $0x8] sm:$0xff]
        %v320 = vld [vmem:[#allocation5 + $0x10] sm:$0xff]
        %v321 = vld [vmem:[#allocation5 + $0x18] sm:$0xff]
        %v322 = vld [vmem:[#allocation5 + $0x20] sm:$0xff]
        %v323 = vld [vmem:[#allocation5 + $0x28] sm:$0xff]
        %v324 = vld [vmem:[#allocation5 + $0x30] sm:$0xff]
        %v325 = vld [vmem:[#allocation5 + $0x38] sm:$0xff]
        %v326 = vld [vmem:[#allocation5 + $0x40] sm:$0xff]
        %v327 = vld [vmem:[#allocation5 + $0x48] sm:$0xff]
        %v328 = vld [vmem:[#allocation5 + $0x50] sm:$0xff]
        %v329 = vld [vmem:[#allocation5 + $0x58] sm:$0xff]
        %v330 = vld [vmem:[#allocation5 + $0x60] sm:$0xff]
        %v331 = vld [vmem:[#allocation5 + $0x68] sm:$0xff]
        %v332 = vld [vmem:[#allocation5 + $0x70] sm:$0xff]
        %v333 = vld [vmem:[#allocation5 + $0x78] sm:$0xff]
        %v334 = vld [vmem:[#allocation5 + $0x80] sm:$0xff]
        %v335 = vld [vmem:[#allocation5 + $0x88] sm:$0xff]
        %v336 = vld [vmem:[#allocation5 + $0x90] sm:$0xff]
        %v337 = vld [vmem:[#allocation5 + $0x98] sm:$0xff]
        %v338 = vld [vmem:[#allocation5 + $0xa0] sm:$0xff]
        %v339 = vld [vmem:[#allocation5 + $0xa8] sm:$0xff]
        %v340 = vld [vmem:[#allocation5 + $0xb0] sm:$0xff]
        %v341 = vld [vmem:[#allocation5 + $0xb8] sm:$0xff]
        %v342 = vld [vmem:[#allocation5 + $0xc0] sm:$0xff]
        %v343 = vld [vmem:[#allocation5 + $0xc8] sm:$0xff]
        %v344 = vld [vmem:[#allocation5 + $0xd0] sm:$0xff]
        %v345 = vld [vmem:[%s2] sm:$0x3]
        %v347 = vlaneseq
        %v348 = vshrl.u32 %v347, 7
        %v349 = vsub.s32 0, %v348
        %v350 = vrot.slane %v345, %v349
        %v351 = vlaneseq
        %v352 = vshrl.u32 %v351, 7
        %v353 = vsub.s32 1, %v352
        %v354 = vrot.slane %v345, %v353
        %v373 = vunpack.c.l.b16 %v302
        %v374 = vunpack.c.h.b16 %v302
        %v375 = vunpack.c.l.b16 %v303
        %v376 = vunpack.c.h.b16 %v303
        %v377 = vunpack.c.l.b16 %v304
        %v378 = vunpack.c.h.b16 %v304
        %v379 = vunpack.c.l.b16 %v305
        %v380 = vunpack.c.h.b16 %v305
        %v381 = vunpack.c.l.b16 %v306
        %v382 = vunpack.c.h.b16 %v306
        %v383 = vunpack.c.l.b16 %v307
        %v384 = vunpack.c.h.b16 %v307
        %v385 = vunpack.c.l.b16 %v308
        %v386 = vunpack.c.h.b16 %v308
        %v387 = vunpack.c.l.b16 %v309
        %v388 = vunpack.c.h.b16 %v309
        %v389 = vunpack.c.l.b16 %v310
        %v390 = vunpack.c.h.b16 %v310
        %v391 = vunpack.c.l.b16 %v311
        %v392 = vunpack.c.h.b16 %v311
        %v393 = vunpack.c.l.b16 %v312
        %v394 = vunpack.c.h.b16 %v312
        %v395 = vunpack.c.l.b16 %v313
        %v396 = vunpack.c.h.b16 %v313
        %v397 = vunpack.c.l.b16 %v314
        %v398 = vunpack.c.h.b16 %v314
        %v399 = vunpack.c.l.b16 %v315
        %v400 = vunpack.c.h.b16 %v315
        %v401 = vunpack.c.l.b16 %v316
        %v402 = vunpack.c.h.b16 %v316
        %v403 = vunpack.c.l.b16 %v317
        %v404 = vunpack.c.h.b16 %v317
        %v405 = vpack.c.b16 %v375, %v373
        %v406 = vpack.c.b16 %v376, %v374
        %v407 = vpack.c.b16 %v379, %v377
        %v408 = vpack.c.b16 %v380, %v378
        %v409 = vpack.c.b16 %v383, %v381
        %v410 = vpack.c.b16 %v384, %v382
        %v411 = vpack.c.b16 %v387, %v385
        %v412 = vpack.c.b16 %v388, %v386
        %v413 = vpack.c.b16 %v391, %v389
        %v414 = vpack.c.b16 %v392, %v390
        %v415 = vpack.c.b16 %v395, %v393
        %v416 = vpack.c.b16 %v396, %v394
        %v417 = vpack.c.b16 %v399, %v397
        %v418 = vpack.c.b16 %v400, %v398
        %v419 = vpack.c.b16 %v403, %v401
        %v420 = vpack.c.b16 %v404, %v402
        %v456 = vunpack.c.l.b16 %v318
        %v457 = vunpack.c.h.b16 %v318
        %v458 = vunpack.c.l.b16 %v319
        %v459 = vunpack.c.h.b16 %v319
        %v460 = vunpack.c.l.b16 %v320
        %v461 = vunpack.c.h.b16 %v320
        %v462 = vunpack.c.l.b16 %v321
        %v463 = vunpack.c.h.b16 %v321
        %v464 = vunpack.c.l.b16 %v322
        %v465 = vunpack.c.h.b16 %v322
        %v466 = vunpack.c.l.b16 %v323
        %v467 = vunpack.c.h.b16 %v323
        %v468 = vunpack.c.l.b16 %v324
        %v469 = vunpack.c.h.b16 %v324
        %v470 = vunpack.c.l.b16 %v325
        %v471 = vunpack.c.h.b16 %v325
        %v472 = vunpack.c.l.b16 %v326
        %v473 = vunpack.c.h.b16 %v326
        %v474 = vunpack.c.l.b16 %v327
        %v475 = vunpack.c.h.b16 %v327
        %v476 = vunpack.c.l.b16 %v328
        %v477 = vunpack.c.h.b16 %v328
        %v478 = vunpack.c.l.b16 %v329
        %v479 = vunpack.c.h.b16 %v329
        %v480 = vunpack.c.l.b16 %v330
        %v481 = vunpack.c.h.b16 %v330
        %v482 = vunpack.c.l.b16 %v331
        %v483 = vunpack.c.h.b16 %v331
        %v484 = vunpack.c.l.b16 %v332
        %v485 = vunpack.c.h.b16 %v332
        %v486 = vunpack.c.l.b16 %v333
        %v487 = vunpack.c.h.b16 %v333
        %v488 = vunpack.c.l.b16 %v334
        %v489 = vunpack.c.h.b16 %v334
        %v490 = vunpack.c.l.b16 %v335
        %v491 = vunpack.c.h.b16 %v335
        %v492 = vunpack.c.l.b16 %v336
        %v493 = vunpack.c.h.b16 %v336
        %v494 = vunpack.c.l.b16 %v337
        %v495 = vunpack.c.h.b16 %v337
        %v496 = vunpack.c.l.b16 %v338
        %v497 = vunpack.c.h.b16 %v338
        %v498 = vunpack.c.l.b16 %v339
        %v499 = vunpack.c.h.b16 %v339
        %v500 = vunpack.c.l.b16 %v340
        %v501 = vunpack.c.h.b16 %v340
        %v502 = vunpack.c.l.b16 %v341
        %v503 = vunpack.c.h.b16 %v341
        %v504 = vunpack.c.l.b16 %v342
        %v505 = vunpack.c.h.b16 %v342
        %v506 = vunpack.c.l.b16 %v343
        %v507 = vunpack.c.h.b16 %v343
        %v508 = vunpack.c.l.b16 %v344
        %v509 = vunpack.c.h.b16 %v344
        %v510 = vpack.c.b16 %v458, %v456
        %v511 = vpack.c.b16 %v459, %v457
        %v512 = vpack.c.b16 %v462, %v460
        %v513 = vpack.c.b16 %v463, %v461
        %v514 = vpack.c.b16 %v466, %v464
        %v515 = vpack.c.b16 %v467, %v465
        %v516 = vpack.c.b16 %v470, %v468
        %v517 = vpack.c.b16 %v471, %v469
        %v518 = vpack.c.b16 %v474, %v472
        %v519 = vpack.c.b16 %v475, %v473
        %v520 = vpack.c.b16 %v478, %v476
        %v521 = vpack.c.b16 %v479, %v477
        %v522 = vpack.c.b16 %v482, %v480
        %v523 = vpack.c.b16 %v483, %v481
        %v524 = vpack.c.b16 %v486, %v484
        %v525 = vpack.c.b16 %v487, %v485
        %v526 = vpack.c.b16 %v490, %v488
        %v527 = vpack.c.b16 %v491, %v489
        %v528 = vpack.c.b16 %v494, %v492
        %v529 = vpack.c.b16 %v495, %v493
        %v530 = vpack.c.b16 %v498, %v496
        %v531 = vpack.c.b16 %v499, %v497
        %v532 = vpack.c.b16 %v502, %v500
        %v533 = vpack.c.b16 %v503, %v501
        %v534 = vpack.c.b16 %v506, %v504
        %v535 = vpack.c.b16 %v507, %v505
        %v536 = vpack.c.b16 %v508, %v508
        %v537 = vpack.c.b16 %v509, %v509
        %vm564 = vcmask 719872
        %v566 = vsel %vm564, %v406, 0
        %v569 = vsel %vm564, %v408, 0
        %v572 = vsel %vm564, %v410, 0
        %v575 = vsel %vm564, %v412, 0
        %v578 = vsel %vm564, %v414, 0
        %v581 = vsel %vm564, %v416, 0
        %v584 = vsel %vm564, %v418, 0
        %v587 = vsel %vm564, %v420, 0
        %vm589 = vcmask 1043456
        %v591 = vsel %vm589, %v536, 0
        %v594 = vsel %vm589, %v537, 0
        %596 = vmatprep.subr.bf16.mxu0 %v511
        %597 = vmatpush1.bf16.msra.mxu0 %v510
        %598 = vmatprep.subr.bf16.mxu0 %v513
        %599 = vmatpush1.bf16.msra.mxu0 %v512
        %600 = vmatprep.subr.bf16.mxu0 %v515
        %601 = vmatpush1.bf16.msra.mxu0 %v514
        %602 = vmatprep.subr.bf16.mxu0 %v517
        %603 = vmatpush1.bf16.msra.mxu0 %v516
        %604 = vmatprep.subr.bf16.mxu0 %v519
        %605 = vmatpush1.bf16.msra.mxu0 %v518
        %606 = vmatprep.subr.bf16.mxu0 %v521
        %607 = vmatpush1.bf16.msra.mxu0 %v520
        %608 = vmatprep.subr.bf16.mxu0 %v523
        %609 = vmatpush1.bf16.msra.mxu0 %v522
        %610 = vmatprep.subr.bf16.mxu0 %v525
        %611 = vmatpush1.bf16.msra.mxu0 %v524
        %612 = vmatprep.subr.bf16.mxu0 %v527
        %613 = vmatpush1.bf16.msra.mxu0 %v526
        %614 = vmatprep.subr.bf16.mxu0 %v529
        %615 = vmatpush1.bf16.msra.mxu0 %v528
        %616 = vmatprep.subr.bf16.mxu0 %v531
        %617 = vmatpush1.bf16.msra.mxu0 %v530
        %618 = vmatprep.subr.bf16.mxu0 %v533
        %619 = vmatpush1.bf16.msra.mxu0 %v532
        %620 = vmatprep.subr.bf16.mxu0 %v535
        %621 = vmatpush1.bf16.msra.mxu0 %v534
        %622 = vmatprep.subr.bf16.mxu0 %v594
        %623 = vmatpush1.bf16.msra.mxu0 %v591
        %624 = vmatprep.subr.bf16.mxu0 0
        %625 = vmatpush1.bf16.msra.mxu0 0
        %626 = vmatprep.subr.bf16.mxu0 0
        %627 = vmatpush1.bf16.msra.mxu0 0
        %628 = vmatprep.mubr.bf16.mxu0 %v566
        %629 = vmatmul.mubr.bf16.gmra.mrb[0].mxu0 %v405
        %v630 = vpop.f32.mrb[0].mxu0
        %v631 = vadd.f32 %v350, %v630
        %v632 = vpop.f32.mrb[0].mxu0
        %v633 = vadd.f32 %v354, %v632
        %v634 = vpop.f32.mrb[0].mxu0
        %v635 = vadd.f32 %v350, %v634
        %v636 = vpop.f32.mrb[0].mxu0
        %v637 = vadd.f32 %v354, %v636
        %638 = vmatprep.mubr.bf16.mxu0 %v569
        %639 = vmatmul.mubr.bf16.gmra.mrb[0].mxu0 %v407
        %v640 = vpop.f32.mrb[0].mxu0
        %v641 = vadd.f32 %v350, %v640
        %v642 = vpop.f32.mrb[0].mxu0
        %v643 = vadd.f32 %v354, %v642
        %v644 = vpop.f32.mrb[0].mxu0
        %v645 = vadd.f32 %v350, %v644
        %v646 = vpop.f32.mrb[0].mxu0
        %v647 = vadd.f32 %v354, %v646
        %648 = vmatprep.mubr.bf16.mxu0 %v572
        %649 = vmatmul.mubr.bf16.gmra.mrb[0].mxu0 %v409
        %v650 = vpop.f32.mrb[0].mxu0
        %v651 = vadd.f32 %v350, %v650
        %v652 = vpop.f32.mrb[0].mxu0
        %v653 = vadd.f32 %v354, %v652
        %v654 = vpop.f32.mrb[0].mxu0
        %v655 = vadd.f32 %v350, %v654
        %v656 = vpop.f32.mrb[0].mxu0
        %v657 = vadd.f32 %v354, %v656
        %658 = vmatprep.mubr.bf16.mxu0 %v575
        %659 = vmatmul.mubr.bf16.gmra.mrb[0].mxu0 %v411
        %v660 = vpop.f32.mrb[0].mxu0
        %v661 = vadd.f32 %v350, %v660
        %v662 = vpop.f32.mrb[0].mxu0
        %v663 = vadd.f32 %v354, %v662
        %v664 = vpop.f32.mrb[0].mxu0
        %v665 = vadd.f32 %v350, %v664
        %v666 = vpop.f32.mrb[0].mxu0
        %v667 = vadd.f32 %v354, %v666
        %668 = vmatprep.mubr.bf16.mxu0 %v578
        %669 = vmatmul.mubr.bf16.gmra.mrb[0].mxu0 %v413
        %v670 = vpop.f32.mrb[0].mxu0
        %v671 = vadd.f32 %v350, %v670
        %v672 = vpop.f32.mrb[0].mxu0
        %v673 = vadd.f32 %v354, %v672
        %v674 = vpop.f32.mrb[0].mxu0
        %v675 = vadd.f32 %v350, %v674
        %v676 = vpop.f32.mrb[0].mxu0
        %v677 = vadd.f32 %v354, %v676
        %678 = vmatprep.mubr.bf16.mxu0 %v581
        %679 = vmatmul.mubr.bf16.gmra.mrb[0].mxu0 %v415
        %v680 = vpop.f32.mrb[0].mxu0
        %v681 = vadd.f32 %v350, %v680
        %v682 = vpop.f32.mrb[0].mxu0
        %v683 = vadd.f32 %v354, %v682
        %v684 = vpop.f32.mrb[0].mxu0
        %v685 = vadd.f32 %v350, %v684
        %v686 = vpop.f32.mrb[0].mxu0
        %v687 = vadd.f32 %v354, %v686
        %688 = vmatprep.mubr.bf16.mxu0 %v584
        %689 = vmatmul.mubr.bf16.gmra.mrb[0].mxu0 %v417
        %v690 = vpop.f32.mrb[0].mxu0
        %v691 = vadd.f32 %v350, %v690
        %v692 = vpop.f32.mrb[0].mxu0
        %v693 = vadd.f32 %v354, %v692
        %v694 = vpop.f32.mrb[0].mxu0
        %v695 = vadd.f32 %v350, %v694
        %v696 = vpop.f32.mrb[0].mxu0
        %v697 = vadd.f32 %v354, %v696
        %698 = vmatprep.mubr.bf16.mxu0 %v587
        %699 = vmatmul.mubr.bf16.gmra.mrb[0].mxu0 %v419
        %v700 = vpop.f32.mrb[0].mxu0
        %v701 = vadd.f32 %v350, %v700
        %v702 = vpop.f32.mrb[0].mxu0
        %v703 = vadd.f32 %v354, %v702
        %v704 = vpop.f32.mrb[0].mxu0
        %v705 = vadd.f32 %v350, %v704
        %v706 = vpop.f32.mrb[0].mxu0
        %v707 = vadd.f32 %v354, %v706
        %708 = vdwg.mxu0
        %v709 = vpack.c.bf16 %v635, %v631
        %v710 = vpack.c.bf16 %v637, %v633
        %v711 = vpack.c.bf16 %v645, %v641
        %v712 = vpack.c.bf16 %v647, %v643
        %v713 = vpack.c.bf16 %v655, %v651
        %v714 = vpack.c.bf16 %v657, %v653
        %v715 = vpack.c.bf16 %v665, %v661
        %v716 = vpack.c.bf16 %v667, %v663
        %v717 = vpack.c.bf16 %v675, %v671
        %v718 = vpack.c.bf16 %v677, %v673
        %v719 = vpack.c.bf16 %v685, %v681
        %v720 = vpack.c.bf16 %v687, %v683
        %v721 = vpack.c.bf16 %v695, %v691
        %v722 = vpack.c.bf16 %v697, %v693
        %v723 = vpack.c.bf16 %v705, %v701
        %v724 = vpack.c.bf16 %v707, %v703
        %v741 = vunpack.c.l.b16 %v709
        %v742 = vunpack.c.l.b16 %v710
        %v743 = vunpack.c.h.b16 %v709
        %v744 = vunpack.c.h.b16 %v710
        %v745 = vunpack.c.l.b16 %v711
        %v746 = vunpack.c.l.b16 %v712
        %v747 = vunpack.c.h.b16 %v711
        %v748 = vunpack.c.h.b16 %v712
        %v749 = vunpack.c.l.b16 %v713
        %v750 = vunpack.c.l.b16 %v714
        %v751 = vunpack.c.h.b16 %v713
        %v752 = vunpack.c.h.b16 %v714
        %v753 = vunpack.c.l.b16 %v715
        %v754 = vunpack.c.l.b16 %v716
        %v755 = vunpack.c.h.b16 %v715
        %v756 = vunpack.c.h.b16 %v716
        %v757 = vunpack.c.l.b16 %v717
        %v758 = vunpack.c.l.b16 %v718
        %v759 = vunpack.c.h.b16 %v717
        %v760 = vunpack.c.h.b16 %v718
        %v761 = vunpack.c.l.b16 %v719
        %v762 = vunpack.c.l.b16 %v720
        %v763 = vunpack.c.h.b16 %v719
        %v764 = vunpack.c.h.b16 %v720
        %v765 = vunpack.c.l.b16 %v721
        %v766 = vunpack.c.l.b16 %v722
        %v767 = vunpack.c.h.b16 %v721
        %v768 = vunpack.c.h.b16 %v722
        %v769 = vunpack.c.l.b16 %v723
        %v770 = vunpack.c.l.b16 %v724
        %v771 = vunpack.c.h.b16 %v723
        %v772 = vunpack.c.h.b16 %v724
        %v773 = vpack.c.b16 %v742, %v741
        %v774 = vpack.c.b16 %v744, %v743
        %v775 = vpack.c.b16 %v746, %v745
        %v776 = vpack.c.b16 %v748, %v747
        %v777 = vpack.c.b16 %v750, %v749
        %v778 = vpack.c.b16 %v752, %v751
        %v779 = vpack.c.b16 %v754, %v753
        %v780 = vpack.c.b16 %v756, %v755
        %v781 = vpack.c.b16 %v758, %v757
        %v782 = vpack.c.b16 %v760, %v759
        %v783 = vpack.c.b16 %v762, %v761
        %v784 = vpack.c.b16 %v764, %v763
        %v785 = vpack.c.b16 %v766, %v765
        %v786 = vpack.c.b16 %v768, %v767
        %v787 = vpack.c.b16 %v770, %v769
        %v788 = vpack.c.b16 %v772, %v771
        %805 = vst [vmem:[%s284] sm:$0xff] %v773
        %806 = vst [vmem:[%s284 + $0x8] sm:$0xff] %v774
        %807 = vst [vmem:[%s284 + $0x10] sm:$0xff] %v775
        %808 = vst [vmem:[%s284 + $0x18] sm:$0xff] %v776
        %809 = vst [vmem:[%s284 + $0x20] sm:$0xff] %v777
        %810 = vst [vmem:[%s284 + $0x28] sm:$0xff] %v778
        %811 = vst [vmem:[%s284 + $0x30] sm:$0xff] %v779
        %812 = vst [vmem:[%s284 + $0x38] sm:$0xff] %v780
        %813 = vst [vmem:[%s284 + $0x40] sm:$0xff] %v781
        %814 = vst [vmem:[%s284 + $0x48] sm:$0xff] %v782
        %815 = vst [vmem:[%s284 + $0x50] sm:$0xff] %v783
        %816 = vst [vmem:[%s284 + $0x58] sm:$0xff] %v784
        %817 = vst [vmem:[%s284 + $0x60] sm:$0xff] %v785
        %818 = vst [vmem:[%s284 + $0x68] sm:$0xff] %v786
        %819 = vst [vmem:[%s284 + $0x70] sm:$0xff] %v787
        %820 = vst [vmem:[%s284 + $0x78] sm:$0xff] %v788
        %v821 = vunpack.c.l.bf16 %v709
        %v822 = vunpack.c.l.bf16 %v710
        %v823 = vunpack.c.h.bf16 %v709
        %v824 = vunpack.c.h.bf16 %v710
        %v825 = vunpack.c.l.bf16 %v711
        %v826 = vunpack.c.l.bf16 %v712
        %v827 = vunpack.c.h.bf16 %v711
        %v828 = vunpack.c.h.bf16 %v712
        %v829 = vunpack.c.l.bf16 %v713
        %v830 = vunpack.c.l.bf16 %v714
        %v831 = vunpack.c.h.bf16 %v713
        %v832 = vunpack.c.h.bf16 %v714
        %v833 = vunpack.c.l.bf16 %v715
        %v834 = vunpack.c.l.bf16 %v716
        %v835 = vunpack.c.h.bf16 %v715
        %v836 = vunpack.c.h.bf16 %v716
        %v837 = vunpack.c.l.bf16 %v717
        %v838 = vunpack.c.l.bf16 %v718
        %v839 = vunpack.c.h.bf16 %v717
        %v840 = vunpack.c.h.bf16 %v718
        %v841 = vunpack.c.l.bf16 %v719
        %v842 = vunpack.c.l.bf16 %v720
        %v843 = vunpack.c.h.bf16 %v719
        %v844 = vunpack.c.h.bf16 %v720
        %v845 = vunpack.c.l.bf16 %v721
        %v846 = vunpack.c.l.bf16 %v722
        %v847 = vunpack.c.h.bf16 %v721
        %v848 = vunpack.c.h.bf16 %v722
        %v849 = vunpack.c.l.bf16 %v723
        %v850 = vunpack.c.l.bf16 %v724
        %v851 = vunpack.c.h.bf16 %v723
        %v852 = vunpack.c.h.bf16 %v724
        %v853 = vadd.f32 %v821, %v823
        %v854 = vadd.f32 %v853, %v825
        %v855 = vadd.f32 %v854, %v827
        %v856 = vadd.f32 %v855, %v829
        %v857 = vadd.f32 %v856, %v831
        %v858 = vadd.f32 %v857, %v833
        %v859 = vadd.f32 %v858, %v835
        %v860 = vadd.f32 %v859, %v837
        %v861 = vadd.f32 %v860, %v839
        %v862 = vadd.f32 %v861, %v841
        %v863 = vadd.f32 %v862, %v843
        %v864 = vadd.f32 %v863, %v845
        %v865 = vadd.f32 %v864, %v847
        %v866 = vadd.f32 %v865, %v849
        %v867 = vadd.f32 %v866, %v851
        %v868 = vrot.slane %v867, 4
        %v869 = vadd.f32 %v867, %v868
        %v870 = vrot.slane %v869, 2
        %v871 = vadd.f32 %v869, %v870
        %v872 = vrot.slane %v871, 1
        %v873 = vadd.f32 %v871, %v872
        %v874 = vadd.f32 %v822, %v824
        %v875 = vadd.f32 %v874, %v826
        %v876 = vadd.f32 %v875, %v828
        %v877 = vadd.f32 %v876, %v830
        %v878 = vadd.f32 %v877, %v832
        %v879 = vadd.f32 %v878, %v834
        %v880 = vadd.f32 %v879, %v836
        %v881 = vadd.f32 %v880, %v838
        %v882 = vadd.f32 %v881, %v840
        %v883 = vadd.f32 %v882, %v842
        %v884 = vadd.f32 %v883, %v844
        %v885 = vadd.f32 %v884, %v846
        %v886 = vadd.f32 %v885, %v848
        %v887 = vadd.f32 %v886, %v850
        %v888 = vadd.f32 %v887, %v852
        %v889 = vrot.slane %v888, 4
        %v890 = vadd.f32 %v888, %v889
        %v891 = vrot.slane %v890, 2
        %v892 = vadd.f32 %v890, %v891
        %v893 = vrot.slane %v892, 1
        %v894 = vadd.f32 %v892, %v893
        %v897 = vcombine.low %v873, %v894
        %v899 = vunpack.c.l.s4 1966171168
        %v900 = vunpack.c.0.s8 %v899
        %v901 = vlaneseq
        %v902 = vshrl.u32 %v901, 7
        %v903 = vsub.s32 %v900, %v902
        %v904 = vrot.slane %v897, %v903
        %v906 = vunpack.c.l.s4 1966171168
        %v907 = vunpack.c.0.s8 %v906
        %v908 = vlaneseq
        %v909 = vshrl.u32 %v908, 7
        %v910 = vsub.s32 %v907, %v909
        %v911 = vrot.slane %v904, %v910
        %v913 = vlaneseq
        %vm914 = vcmp.ge.s32.totalorder %v913, 0
        %vm915 = vcmp.lt.s32.totalorder %v913, 256
        %vm916 = vmand %vm914, %vm915
        %917 = vst.msk [vmem:[%s291] sm:$0x3] %vm916, %v911
        %v918 = vmul.f32 %v821, %v821
        %v919 = vmul.f32 %v822, %v822
        %v920 = vmul.f32 %v823, %v823
        %v921 = vmul.f32 %v824, %v824
        %v922 = vmul.f32 %v825, %v825
        %v923 = vmul.f32 %v826, %v826
        %v924 = vmul.f32 %v827, %v827
        %v925 = vmul.f32 %v828, %v828
        %v926 = vmul.f32 %v829, %v829
        %v927 = vmul.f32 %v830, %v830
        %v928 = vmul.f32 %v831, %v831
        %v929 = vmul.f32 %v832, %v832
        %v930 = vmul.f32 %v833, %v833
        %v931 = vmul.f32 %v834, %v834
        %v932 = vmul.f32 %v835, %v835
        %v933 = vmul.f32 %v836, %v836
        %v934 = vmul.f32 %v837, %v837
        %v935 = vmul.f32 %v838, %v838
        %v936 = vmul.f32 %v839, %v839
        %v937 = vmul.f32 %v840, %v840
        %v938 = vmul.f32 %v841, %v841
        %v939 = vmul.f32 %v842, %v842
        %v940 = vmul.f32 %v843, %v843
        %v941 = vmul.f32 %v844, %v844
        %v942 = vmul.f32 %v845, %v845
        %v943 = vmul.f32 %v846, %v846
        %v944 = vmul.f32 %v847, %v847
        %v945 = vmul.f32 %v848, %v848
        %v946 = vmul.f32 %v849, %v849
        %v947 = vmul.f32 %v850, %v850
        %v948 = vmul.f32 %v851, %v851
        %v949 = vmul.f32 %v852, %v852
        %v950 = vadd.f32 %v918, %v920
        %v951 = vadd.f32 %v950, %v922
        %v952 = vadd.f32 %v951, %v924
        %v953 = vadd.f32 %v952, %v926
        %v954 = vadd.f32 %v953, %v928
        %v955 = vadd.f32 %v954, %v930
        %v956 = vadd.f32 %v955, %v932
        %v957 = vadd.f32 %v956, %v934
        %v958 = vadd.f32 %v957, %v936
        %v959 = vadd.f32 %v958, %v938
        %v960 = vadd.f32 %v959, %v940
        %v961 = vadd.f32 %v960, %v942
        %v962 = vadd.f32 %v961, %v944
        %v963 = vadd.f32 %v962, %v946
        %v964 = vadd.f32 %v963, %v948
        %v965 = vrot.slane %v964, 4
        %v966 = vadd.f32 %v964, %v965
        %v967 = vrot.slane %v966, 2
        %v968 = vadd.f32 %v966, %v967
        %v969 = vrot.slane %v968, 1
        %v970 = vadd.f32 %v968, %v969
        %v971 = vadd.f32 %v919, %v921
        %v972 = vadd.f32 %v971, %v923
        %v973 = vadd.f32 %v972, %v925
        %v974 = vadd.f32 %v973, %v927
        %v975 = vadd.f32 %v974, %v929
        %v976 = vadd.f32 %v975, %v931
        %v977 = vadd.f32 %v976, %v933
        %v978 = vadd.f32 %v977, %v935
        %v979 = vadd.f32 %v978, %v937
        %v980 = vadd.f32 %v979, %v939
        %v981 = vadd.f32 %v980, %v941
        %v982 = vadd.f32 %v981, %v943
        %v983 = vadd.f32 %v982, %v945
        %v984 = vadd.f32 %v983, %v947
        %v985 = vadd.f32 %v984, %v949
        %v986 = vrot.slane %v985, 4
        %v987 = vadd.f32 %v985, %v986
        %v988 = vrot.slane %v987, 2
        %v989 = vadd.f32 %v987, %v988
        %v990 = vrot.slane %v989, 1
        %v991 = vadd.f32 %v989, %v990
        %v994 = vcombine.low %v970, %v991
        %v996 = vunpack.c.l.s4 1966171168
        %v997 = vunpack.c.0.s8 %v996
        %v998 = vlaneseq
        %v999 = vshrl.u32 %v998, 7
        %v1000 = vsub.s32 %v997, %v999
        %v1001 = vrot.slane %v994, %v1000
        %v1003 = vunpack.c.l.s4 1966171168
        %v1004 = vunpack.c.0.s8 %v1003
        %v1005 = vlaneseq
        %v1006 = vshrl.u32 %v1005, 7
        %v1007 = vsub.s32 %v1004, %v1006
        %v1008 = vrot.slane %v1001, %v1007
        %1010 = vst.msk [vmem:[%s298] sm:$0x3] %vm916, %v1008
        %s1011 = sand.u32 %s119, 1
        %s1012 = scalar_lea.sflag [#allocation4], %s1011
        %s1013 = sand.u32 %s119, 1
        %s1014 = smul.addr %s1013, 128
        %s1015 = scalar_lea.vmem [#allocation7], %s1014
        %s1016 = sand.u32 %s27, 1
        %s1017 = scalar_lea.sflag [#allocation9], %s1016
        %s1018 = sand.u32 %s147, 1
        %s1019 = smul.addr %s1018, 2
        %s1020 = scalar_lea.vmem [#allocation8], %s1019
        %s1021 = sand.u32 %s27, 1
        %s1022 = scalar_lea.sflag [#allocation9], %s1021
        %s1023 = sand.u32 %s175, 1
        %s1024 = smul.addr %s1023, 2
        %s1025 = scalar_lea.vmem [#allocation10], %s1024
        // Predicated region
        $region41: #{tpu_custom_call.1} parent=31 // pred_check
          %p1026 = pneg %p129
        $region42: #{tpu_custom_call.1} parent=31 // pred_check_branch
          %1028 = sbr.rel (%p1026) target = $region44
        $region43: #{tpu_custom_call.1} parent=31 // pred_region
          %s1029 = smul.u32 8, %s32
          %s1031 = ssub.s32 2048, 2048
          %1032 = vsyncadd %s1012, %s1031
          %s1033 = smul.addr %s1029, 4
          %s1034 = smul.addr %s31, 32
          %s1035 = sadd.s32 %s1033, %s1034
          %s1036 = smul.addr %s1035, 64
          %s1037 = scalar_lea.hbm %s3, %s1036
          %s1038 = sshll.u32 %s1015, 4
          %s1039 = int_to_ptr.vmem [resolvable:$true] %s1038
          %1044 = dma.vmem_to_hbm [thread:$0]  %s1039, 2048, %s1037, %s1012, 128, 128, 8
        $region44: #{tpu_custom_call.1} parent=31 // pred_fallthru
          _
        // Predicated region
        $region45: #{tpu_custom_call.1} parent=31 // pred_check
          %p1045 = pneg %p157
        $region46: #{tpu_custom_call.1} parent=31 // pred_check_branch
          %1047 = sbr.rel (%p1045) target = $region48
        $region47: #{tpu_custom_call.1} parent=31 // pred_region
          %s1049 = ssub.s32 32, 32
          %1050 = vsyncadd %s1017, %s1049
          %s1051 = smul.addr %s32, 2
          %s1052 = smul.addr %s31, 2
          %s1053 = sadd.s32 %s1051, %s1052
          %s1054 = smul.addr %s1053, 16
          %s1055 = scalar_lea.hbm %s4, %s1054
          %s1057 = sshll.u32 %s1020, 4
          %s1058 = int_to_ptr.vmem [resolvable:$true] %s1057
          %1060 = dma.vmem_to_hbm [thread:$0]  %s1058, 32, %s1055, %s1017
        $region48: #{tpu_custom_call.1} parent=31 // pred_fallthru
          _
        // Predicated region
        $region49: #{tpu_custom_call.1} parent=31 // pred_check
          %p1061 = pneg %p185
        $region50: #{tpu_custom_call.1} parent=31 // pred_check_branch
          %1063 = sbr.rel (%p1061) target = $region52
        $region51: #{tpu_custom_call.1} parent=31 // pred_region
          %s1065 = ssub.s32 32, 32
          %1066 = vsyncadd %s1022, %s1065
          %s1067 = smul.addr %s32, 2
          %s1068 = smul.addr %s31, 2
          %s1069 = sadd.s32 %s1067, %s1068
          %s1070 = smul.addr %s1069, 16
          %s1071 = scalar_lea.hbm %s5, %s1070
          %s1073 = sshll.u32 %s1025, 4
          %s1074 = int_to_ptr.vmem [resolvable:$true] %s1073
          %1076 = dma.vmem_to_hbm [thread:$0]  %s1074, 32, %s1071, %s1022
        $region52: #{tpu_custom_call.1} parent=31 // pred_fallthru
          _
      $region32: #{tpu_custom_call.1} parent=5 // pred_fallthru
        _
      %p1077 = scmp.le.s32.totalorder 2, %s22
      // Predicated region
      $region53: #{tpu_custom_call.1} parent=5 // pred_check
        %p1078 = pneg %p1077
      $region54: #{tpu_custom_call.1} parent=5 // pred_check_branch
        %1080 = sbr.rel (%p1078) target = $region56
      $region55: #{tpu_custom_call.1} parent=5 // pred_region
        %s1081 = ssub.s32 %s22, 2
        // Predicated region
        $region57: #{tpu_custom_call.1} parent=55 // pred_check
          %p1082 = pneg %p135
        $region58: #{tpu_custom_call.1} parent=55 // pred_check_branch
          %1084 = sbr.rel (%p1082) target = $region60
        $region59: #{tpu_custom_call.1} parent=55 // pred_region
          %s1085 = sand.u32 %s120, 1
          %s1086 = scalar_lea.sflag [#allocation4], %s1085
          %s1087 = sand.u32 %s120, 1
          %s1088 = smul.addr %s1087, 128
          %s1089 = scalar_lea.vmem [#allocation7], %s1088
          %1090 = dma.done %s1086, 2048
        $region60: #{tpu_custom_call.1} parent=55 // pred_fallthru
          _
        // Predicated region
        $region61: #{tpu_custom_call.1} parent=55 // pred_check
          %p1091 = pneg %p163
        $region62: #{tpu_custom_call.1} parent=55 // pred_check_branch
          %1093 = sbr.rel (%p1091) target = $region64
        $region63: #{tpu_custom_call.1} parent=55 // pred_region
          %s1094 = sand.u32 %s28, 1
          %s1095 = scalar_lea.sflag [#allocation9], %s1094
          %s1096 = sand.u32 %s148, 1
          %s1097 = smul.addr %s1096, 2
          %s1098 = scalar_lea.vmem [#allocation8], %s1097
          %1099 = dma.done %s1095, 32
        $region64: #{tpu_custom_call.1} parent=55 // pred_fallthru
          _
        // Predicated region
        $region65: #{tpu_custom_call.1} parent=55 // pred_check
          %p1100 = pneg %p191
        $region66: #{tpu_custom_call.1} parent=55 // pred_check_branch
          %1102 = sbr.rel (%p1100) target = $region68
        $region67: #{tpu_custom_call.1} parent=55 // pred_region
          %s1103 = sand.u32 %s28, 1
          %s1104 = scalar_lea.sflag [#allocation9], %s1103
          %s1105 = sand.u32 %s176, 1
          %s1106 = smul.addr %s1105, 2
          %s1107 = scalar_lea.vmem [#allocation10], %s1106
          %1108 = dma.done %s1104, 32
        $region68: #{tpu_custom_call.1} parent=55 // pred_fallthru
          _
      $region56: #{tpu_custom_call.1} parent=5 // pred_fallthru
        _
    $region6: #{tpu_custom_call.1} parent=1 // loop_footer
      %s26 = sadd.s32 1, %s22
    $region7: #{tpu_custom_call.1} parent=1 // loop_footer_branch
      %21 = sbr.rel target = $region3
    $region8: #{tpu_custom_call.1} parent=1 // loop_exit
      _
    %1109 = vsyncpa [#allocation3], 1
    %s1110 = scalar_lea.sflag [#allocation3], 1
    %1111 = vsyncpa %s1110, 1
    %1112 = vsyncpa [#allocation6], 1
    %1113 = vsyncpa [#allocation4], 1
    %s1114 = scalar_lea.sflag [#allocation4], 1
    %1115 = vsyncpa %s1114, 1
    %1116 = vsyncpa [#allocation9], 1
    %s1117 = scalar_lea.sflag [#allocation9], 1
    %1118 = vsyncpa %s1117, 1

</llo_original>
